<compile_context>
chip_gen: v7x
topology: tpu7x:2x2x1
jax: 0.10.0
libtpu: 0.0.40
codegen_flags: <defaults>
</compile_context>

<pallas_src>
import functools

import numpy as np
import jax
import jax.numpy as jnp
from jax.experimental import pallas as pl
from jax.experimental.pallas import tpu as pltpu

TWO_PI = 2.0 * np.pi
INV_TWO_PI = 1.0 / TWO_PI

# Keep padded per-step VMEM under this (v7x has 64 MiB/TC physical; review
# guidance: stay <= ~40-48 MiB there; trivially fine on v5e/v6e's 128 MiB).
_VMEM_BUDGET_BYTES = 40 * 1024 * 1024


def _round_up(n, m):
    return ((n + m - 1) // m) * m


def _padded2d_bytes(shape, itemsize):
    """Bytes a 2-D f32/bf16 array actually occupies in VMEM ((8,128) tiling)."""
    return _round_up(shape[0], 8) * _round_up(shape[1], 128) * itemsize


def _vonmises_kernel(dim_out,
                     x_ref,
                     wcT_ref, bc_ref,
                     w1T_ref, b1_ref,
                     w2T_ref, b2_ref,
                     out_ref):
    """Feature-major fused forward.

    x_ref   : (TB, F)        batch tile (row-major as stored in HBM)
    wcT_ref : (dim_in, F)    compression weight, pre-transposed
    bc_ref  : (dim_in, 1)
    w1T_ref : (2H, dim_in)   fused angle||kappa hidden weight, pre-transposed
    b1_ref  : (2H, 1)
    w2T_ref : (2D, 2H)       block-diagonal second layer, pre-transposed
    b2_ref  : (2D, 1)
    out_ref : (2D, TB)       [mu ; kappa], batch on the 128-lane axis
    """
    cdt = w1T_ref.dtype  # compute dtype for MXU operands (f32 or bf16)

    x = x_ref[...]

    # compression: comp = wc^T @ x^T -> (dim_in, TB). The only transposed
    # contraction (the x tile); it rides the XLU slot and hides under the MXU.
    comp = jax.lax.dot_general(
        wcT_ref[...], x,
        dimension_numbers=(((1,), (1,)), ((), ())),
        preferred_element_type=jnp.float32)
    comp = jnp.maximum(comp + bc_ref[...], 0.0).astype(cdt)

    # fused angle|kappa hidden layer: (2H, dim_in) @ (dim_in, TB) -> (2H, TB)
    h = jnp.dot(w1T_ref[...], comp, preferred_element_type=jnp.float32)
    h = jnp.maximum(h + b1_ref[...], 0.0).astype(cdt)

    # fused block-diagonal second layer: (2D, 2H) @ (2H, TB) -> (2D, TB)
    pre = jnp.dot(w2T_ref[...], h, preferred_element_type=jnp.float32) + b2_ref[...]

    # Rows [0, D): angle head.  Rows [D, 2D): log-kappa head.  D = 8 here so
    # both slices are sublane-aligned (no relayout, no wasted EUP exp on mu).
    pre_mu = pre[:dim_out, :]
    pre_kappa = pre[dim_out:, :]

    # torch `%` with a positive divisor == x - 2pi * floor(x / 2pi)  (VALU only,
    # keeps the single EUP slot free for the exp below).
    mu_val = pre_mu - TWO_PI * jnp.floor(pre_mu * INV_TWO_PI)
    # kappa = exp(clamp(log_kappa, -3, 3))
    kappa_val = jnp.exp(jnp.clip(pre_kappa, -3.0, 3.0))

    out_ref[pl.ds(0, dim_out), :] = mu_val.astype(out_ref.dtype)
    out_ref[pl.ds(dim_out, dim_out), :] = kappa_val.astype(out_ref.dtype)


def prepare_fused_params(params, compute_dtype=jnp.float32):
    """Fuse the three small MLPs into three matmuls (done ONCE per model).

    Hoisted out of the forward pass per the performance review so the fused
    weights are not rebuilt / re-streamed through HBM on every call.
    Set compute_dtype=jnp.bfloat16 for the bf16 MXU path (accumulation stays
    f32; outputs will drift beyond f32 test tolerances).
    """
    dim_in = params["wc"].shape[1]
    H = params["wa1"].shape[1]
    D = params["wa2"].shape[1]
    wd = compute_dtype

    wcT = params["wc"].T.astype(wd)                                     # (dim_in, F)
    bc = params["bc"].reshape(dim_in, 1).astype(jnp.float32)

    w1T = jnp.concatenate([params["wa1"].T, params["wk1"].T], axis=0)   # (2H, dim_in)
    w1T = w1T.astype(wd)
    b1 = jnp.concatenate([params["ba1"], params["bk1"]],
                         axis=1).reshape(2 * H, 1).astype(jnp.float32)

    w2T = jnp.zeros((2 * D, 2 * H), jnp.float32)
    w2T = w2T.at[:D, :H].set(params["wa2"].T).at[D:, H:].set(params["wk2"].T)
    w2T = w2T.astype(wd)                                                # block-diag
    b2 = jnp.concatenate([params["ba2"], params["bk2"]],
                         axis=1).reshape(2 * D, 1).astype(jnp.float32)

    return dict(wcT=wcT, bc=bc, w1T=w1T, b1=b1, w2T=w2T, b2=b2)


@functools.partial(jax.jit, static_argnames=("block_b",))
def vonmises_density_forward(x, fused, *, block_b=4096):
    """Fused forward pass.

    x: [B, F] float32
    fused: output of prepare_fused_params()
    returns (mu [B, dim_out], kappa [B, dim_out])
    """
    B, F = x.shape
    dim_in = fused["wcT"].shape[0]
    H2 = fused["w1T"].shape[0]          # 2 * hidden
    D2 = fused["w2T"].shape[0]          # 2 * dim_out
    D = D2 // 2

    if x.dtype != fused["wcT"].dtype:
        x = x.astype(fused["wcT"].dtype)
    x_bytes = x.dtype.itemsize
    w_bytes = fused["wcT"].dtype.itemsize

    # ---- per-batch-row VMEM cost with (8,128) layout padding --------------
    #   x tile  (TB, F)  -> lanes padded to 128, double-buffered
    #   out tile(2D, TB) -> lane-dense, double-buffered
    #   comp (dim_in,TB), h (2H,TB), ~4x (2D,TB) for pre/mu/kappa temporaries
    per_row = (2 * _round_up(F, 128) * x_bytes
               + 4 * (2 * _round_up(D2, 8)
                      + _round_up(dim_in, 8)
                      + _round_up(H2, 8)
                      + 4 * _round_up(D2, 8)))

    # ---- batch tiling ------------------------------------------------------
    # Out tile is (2D, TB) with TB on the 128-lane axis -> TB must be a
    # multiple of 128 unless a single block covers the whole batch.
    if B <= 128:
        TB = B
    else:
        TB = max(128, (min(block_b, B) // 128) * 128)
        if B >= 256:
            # keep >= 2 grid steps so both v7x TensorCores get work
            TB = min(TB, max(128, _round_up(pl.cdiv(B, 2), 128)))
        # cap by padded-VMEM budget (v7x-safe)
        tb_cap = max(128, ((_VMEM_BUDGET_BYTES // 2) // per_row) // 128 * 128)
        TB = min(TB, tb_cap)
    grid = (pl.cdiv(B, TB),)
    # NOTE: when TB does not divide B the last block is partial; Pallas masks
    # the out-of-bounds output lanes, and every batch lane is independent
    # through the math, so no jnp.pad of x is needed.

    weight_bytes = 2 * (_padded2d_bytes(fused["wcT"].shape, w_bytes)
                        + _padded2d_bytes(fused["w1T"].shape, w_bytes)
                        + _padded2d_bytes(fused["w2T"].shape, w_bytes)
                        + _padded2d_bytes(fused["bc"].shape, 4)
                        + _padded2d_bytes(fused["b1"].shape, 4)
                        + _padded2d_bytes(fused["b2"].shape, 4))
    vmem_limit = int(min(_VMEM_BUDGET_BYTES,
                         max(4 * 1024 * 1024,
                             per_row * TB + weight_bytes + (2 << 20))))

    in_specs = [
        pl.BlockSpec((TB, F), lambda i: (i, 0)),            # x: batch-tiled
        # Weights / biases: constant index_maps -> VMEM-resident across steps.
        pl.BlockSpec((dim_in, F), lambda i: (0, 0)),         # wcT
        pl.BlockSpec((dim_in, 1), lambda i: (0, 0)),         # bc
        pl.BlockSpec((H2, dim_in), lambda i: (0, 0)),        # w1T (wa1||wk1)^T
        pl.BlockSpec((H2, 1), lambda i: (0, 0)),             # b1
        pl.BlockSpec((D2, H2), lambda i: (0, 0)),            # w2T (block-diag)
        pl.BlockSpec((D2, 1), lambda i: (0, 0)),             # b2
    ]
    out_specs = pl.BlockSpec((D2, TB), lambda i: (0, i))     # lane-dense output

    fused_out = pl.pallas_call(
        functools.partial(_vonmises_kernel, D),
        out_shape=jax.ShapeDtypeStruct((D2, B), jnp.float32),
        grid=grid,
        in_specs=in_specs,
        out_specs=out_specs,
        compiler_params=pltpu.CompilerParams(
            dimension_semantics=("parallel",),
            vmem_limit_bytes=vmem_limit,
        ),
    )(x, fused["wcT"], fused["bc"], fused["w1T"], fused["b1"],
      fused["w2T"], fused["b2"])

    mu = fused_out[:D, :].T       # one small transpose in the wrapper
    kappa = fused_out[D:, :].T
    return mu, kappa


def init_params(key, feat_in, dim_in, dim_out, hidden=32):
    """Deterministic parameter init (synthetic — no checkpoint load)."""
    ks = jax.random.split(key, 5)

    def lin(k, fan_in, fan_out):
        # Kaiming-uniform-ish, like torch.nn.Linear default
        bound = 1.0 / np.sqrt(fan_in)
        kw, kb = jax.random.split(k)
        w = jax.random.uniform(kw, (fan_in, fan_out), jnp.float32, -bound, bound)
        b = jax.random.uniform(kb, (1, fan_out), jnp.float32, -bound, bound)
        return w, b

    wc, bc = lin(ks[0], feat_in, dim_in)      # compression network
    wa1, ba1 = lin(ks[1], dim_in, hidden)     # angle MLP hidden
    wa2, ba2 = lin(ks[2], hidden, dim_out)    # angle MLP out
    wk1, bk1 = lin(ks[3], dim_in, hidden)     # kappa MLP hidden
    wk2, bk2 = lin(ks[4], hidden, dim_out)    # kappa MLP out
    return dict(wc=wc, bc=bc,
                wa1=wa1, ba1=ba1, wa2=wa2, ba2=ba2,
                wk1=wk1, bk1=bk1, wk2=wk2, bk2=bk2)


def reference_forward(x, p):
    """Plain-JAX reference (same positive-divisor mod formula as torch `%`)."""
    comp = jnp.maximum(x @ p["wc"] + p["bc"], 0.0)
    ha = jnp.maximum(comp @ p["wa1"] + p["ba1"], 0.0)
    angle = ha @ p["wa2"] + p["ba2"]
    mu = angle - TWO_PI * jnp.floor(angle * INV_TWO_PI)
    hk = jnp.maximum(comp @ p["wk1"] + p["bk1"], 0.0)
    log_kappa = jnp.clip(hk @ p["wk2"] + p["bk2"], -3.0, 3.0)
    return mu, jnp.exp(log_kappa)


if __name__ == "__main__":
    key = jax.random.PRNGKey(0)
    k_x, k_p = jax.random.split(key)

    B, FEAT_IN, DIM_IN, DIM_OUT = 8, 16, 32, 8
    x = jax.random.normal(k_x, (B, FEAT_IN), jnp.float32)
    params = init_params(k_p, FEAT_IN, DIM_IN, DIM_OUT)

    # Weight fusion done once (hoisted out of the forward pass).
    fused = prepare_fused_params(params, compute_dtype=jnp.float32)

    mu, kappa = vonmises_density_forward(x, fused)
    jax.block_until_ready((mu, kappa))

    mu_ref, kappa_ref = reference_forward(x, params)
    assert mu.shape == (B, DIM_OUT) and kappa.shape == (B, DIM_OUT)

    # mu is an angle in [0, 2pi): compare modulo 2pi (robust to the seam at 0).
    ang_err = np.abs((np.asarray(mu) - np.asarray(mu_ref) + np.pi) % TWO_PI - np.pi)
    assert float(ang_err.max()) < 1e-4, f"mu angular error {float(ang_err.max())}"
    np.testing.assert_allclose(np.asarray(kappa), np.asarray(kappa_ref),
                               rtol=1e-4, atol=1e-5)

    # TODO(synk): loss()/sample() need VonMises log_prob (log I0(kappa)) and
    # rejection sampling — distribution methods are out of scope for the
    # forward-pass kernel.
    print("KERNEL_OK")
</pallas_src>

<mosaic_0001>
module attributes {stable_mosaic.version = 11 : i64} {
  func.func @_vonmises_kernel(%arg0: i32, %arg1: memref<8x16xf32, #tpu.memory_space<vmem>>, %arg2: memref<32x16xf32, #tpu.memory_space<vmem>>, %arg3: memref<32x1xf32, #tpu.memory_space<vmem>>, %arg4: memref<64x32xf32, #tpu.memory_space<vmem>>, %arg5: memref<64x1xf32, #tpu.memory_space<vmem>>, %arg6: memref<16x64xf32, #tpu.memory_space<vmem>>, %arg7: memref<16x1xf32, #tpu.memory_space<vmem>>, %arg8: memref<16x8xf32, #tpu.memory_space<vmem>>) attributes {dimension_semantics = [#tpu.dimension_semantics<parallel>], iteration_bounds = array<i64: 1>, scalar_prefetch = 0 : i64, scratch_operands = 0 : i64, tpu.core_type = #tpu.core_type<tc>, window_params = [{transform_indices = @transform_0, window_bounds = array<i64: 8, 16>}, {pipeline_mode = #tpu.pipeline_mode<synchronous>, transform_indices = @transform_1, window_bounds = array<i64: 32, 16>}, {pipeline_mode = #tpu.pipeline_mode<synchronous>, transform_indices = @transform_2, window_bounds = array<i64: 32, 1>}, {pipeline_mode = #tpu.pipeline_mode<synchronous>, transform_indices = @transform_3, window_bounds = array<i64: 64, 32>}, {pipeline_mode = #tpu.pipeline_mode<synchronous>, transform_indices = @transform_4, window_bounds = array<i64: 64, 1>}, {pipeline_mode = #tpu.pipeline_mode<synchronous>, transform_indices = @transform_5, window_bounds = array<i64: 16, 64>}, {pipeline_mode = #tpu.pipeline_mode<synchronous>, transform_indices = @transform_6, window_bounds = array<i64: 16, 1>}, {transform_indices = @transform_7, window_bounds = array<i64: 16, 8>}]} {
    %c0 = arith.constant 0 : index
    %c0_0 = arith.constant 0 : index
    %0 = vector.load %arg1[%c0, %c0_0] : memref<8x16xf32, #tpu.memory_space<vmem>>, vector<8x16xf32>
    %c0_1 = arith.constant 0 : index
    %c0_2 = arith.constant 0 : index
    %1 = vector.load %arg2[%c0_1, %c0_2] : memref<32x16xf32, #tpu.memory_space<vmem>>, vector<32x16xf32>
    %cst = arith.constant dense<0.000000e+00> : vector<32x8xf32>
    %2 = tpu.matmul %1, %0, %cst {dimension_numbers = #tpu.dot_dimension_numbers<[1], [1], [0], [0], [0, 0, 1, 0], [], []>} : vector<32x16xf32>, vector<8x16xf32>, vector<32x8xf32> -> vector<32x8xf32>
    %c0_3 = arith.constant 0 : index
    %c0_4 = arith.constant 0 : index
    %3 = vector.load %arg3[%c0_3, %c0_4] : memref<32x1xf32, #tpu.memory_space<vmem>>, vector<32x1xf32>
    %4 = vector.broadcast %3 : vector<32x1xf32> to vector<32x8xf32>
    %5 = arith.addf %2, %4 : vector<32x8xf32>
    %cst_5 = arith.constant 0.000000e+00 : f32
    %6 = vector.broadcast %cst_5 : f32 to vector<32x8xf32>
    %7 = arith.maximumf %5, %6 : vector<32x8xf32>
    %c0_6 = arith.constant 0 : index
    %c0_7 = arith.constant 0 : index
    %8 = vector.load %arg4[%c0_6, %c0_7] : memref<64x32xf32, #tpu.memory_space<vmem>>, vector<64x32xf32>
    %cst_8 = arith.constant dense<0.000000e+00> : vector<64x8xf32>
    %9 = tpu.matmul %8, %7, %cst_8 {dimension_numbers = #tpu.dot_dimension_numbers<[1], [0], [0], [1], [0, 0, 1, 1], [], []>} : vector<64x32xf32>, vector<32x8xf32>, vector<64x8xf32> -> vector<64x8xf32>
    %c0_9 = arith.constant 0 : index
    %c0_10 = arith.constant 0 : index
    %10 = vector.load %arg5[%c0_9, %c0_10] : memref<64x1xf32, #tpu.memory_space<vmem>>, vector<64x1xf32>
    %11 = vector.broadcast %10 : vector<64x1xf32> to vector<64x8xf32>
    %12 = arith.addf %9, %11 : vector<64x8xf32>
    %cst_11 = arith.constant 0.000000e+00 : f32
    %13 = vector.broadcast %cst_11 : f32 to vector<64x8xf32>
    %14 = arith.maximumf %12, %13 : vector<64x8xf32>
    %c0_12 = arith.constant 0 : index
    %c0_13 = arith.constant 0 : index
    %15 = vector.load %arg6[%c0_12, %c0_13] : memref<16x64xf32, #tpu.memory_space<vmem>>, vector<16x64xf32>
    %cst_14 = arith.constant dense<0.000000e+00> : vector<16x8xf32>
    %16 = tpu.matmul %15, %14, %cst_14 {dimension_numbers = #tpu.dot_dimension_numbers<[1], [0], [0], [1], [0, 0, 1, 1], [], []>} : vector<16x64xf32>, vector<64x8xf32>, vector<16x8xf32> -> vector<16x8xf32>
    %c0_15 = arith.constant 0 : index
    %c0_16 = arith.constant 0 : index
    %17 = vector.load %arg7[%c0_15, %c0_16] : memref<16x1xf32, #tpu.memory_space<vmem>>, vector<16x1xf32>
    %18 = vector.broadcast %17 : vector<16x1xf32> to vector<16x8xf32>
    %19 = arith.addf %16, %18 : vector<16x8xf32>
    %20 = vector.extract_strided_slice %19 {offsets = [0, 0], sizes = [8, 8], strides = [1, 1]} : vector<16x8xf32> to vector<8x8xf32>
    %21 = vector.extract_strided_slice %19 {offsets = [8, 0], sizes = [8, 8], strides = [1, 1]} : vector<16x8xf32> to vector<8x8xf32>
    %cst_17 = arith.constant 0.159154937 : f32
    %22 = vector.broadcast %cst_17 : f32 to vector<8x8xf32>
    %23 = arith.mulf %20, %22 : vector<8x8xf32>
    %24 = math.floor %23 : vector<8x8xf32>
    %cst_18 = arith.constant 6.28318548 : f32
    %25 = vector.broadcast %cst_18 : f32 to vector<8x8xf32>
    %26 = arith.mulf %25, %24 : vector<8x8xf32>
    %27 = arith.subf %20, %26 : vector<8x8xf32>
    %cst_19 = arith.constant -3.000000e+00 : f32
    %cst_20 = arith.constant 3.000000e+00 : f32
    %28 = vector.broadcast %cst_19 : f32 to vector<8x8xf32>
    %29 = arith.maximumf %28, %21 : vector<8x8xf32>
    %30 = vector.broadcast %cst_20 : f32 to vector<8x8xf32>
    %31 = arith.minimumf %30, %29 : vector<8x8xf32>
    %32 = math.exp %31 : vector<8x8xf32>
    %c0_21 = arith.constant 0 : index
    %c0_22 = arith.constant 0 : index
    %33 = vector.load %arg8[%c0_21, %c0_22] : memref<16x8xf32, #tpu.memory_space<vmem>>, vector<8x8xf32>
    tpu.vector_store %arg8[%c0_21, %c0_22], %27 {strides = array<i32>} : memref<16x8xf32, #tpu.memory_space<vmem>>, vector<8x8xf32>,
    %c8 = arith.constant 8 : index
    %c0_23 = arith.constant 0 : index
    %34 = vector.load %arg8[%c8, %c0_23] : memref<16x8xf32, #tpu.memory_space<vmem>>, vector<8x8xf32>
    tpu.vector_store %arg8[%c8, %c0_23], %32 {strides = array<i32>} : memref<16x8xf32, #tpu.memory_space<vmem>>, vector<8x8xf32>,
    return
  }
  func.func @transform_0(%arg0: i32) -> (i32, i32) {
    %c0_i32 = arith.constant 0 : i32
    %c0_i32_0 = arith.constant 0 : i32
    return %arg0, %c0_i32 : i32, i32
  }
  func.func @transform_1(%arg0: i32) -> (i32, i32) {
    %c0_i32 = arith.constant 0 : i32
    %c0_i32_0 = arith.constant 0 : i32
    %c0_i32_1 = arith.constant 0 : i32
    return %c0_i32, %c0_i32_0 : i32, i32
  }
  func.func @transform_2(%arg0: i32) -> (i32, i32) {
    %c0_i32 = arith.constant 0 : i32
    %c0_i32_0 = arith.constant 0 : i32
    %c0_i32_1 = arith.constant 0 : i32
    return %c0_i32, %c0_i32_0 : i32, i32
  }
  func.func @transform_3(%arg0: i32) -> (i32, i32) {
    %c0_i32 = arith.constant 0 : i32
    %c0_i32_0 = arith.constant 0 : i32
    %c0_i32_1 = arith.constant 0 : i32
    return %c0_i32, %c0_i32_0 : i32, i32
  }
  func.func @transform_4(%arg0: i32) -> (i32, i32) {
    %c0_i32 = arith.constant 0 : i32
    %c0_i32_0 = arith.constant 0 : i32
    %c0_i32_1 = arith.constant 0 : i32
    return %c0_i32, %c0_i32_0 : i32, i32
  }
  func.func @transform_5(%arg0: i32) -> (i32, i32) {
    %c0_i32 = arith.constant 0 : i32
    %c0_i32_0 = arith.constant 0 : i32
    %c0_i32_1 = arith.constant 0 : i32
    return %c0_i32, %c0_i32_0 : i32, i32
  }
  func.func @transform_6(%arg0: i32) -> (i32, i32) {
    %c0_i32 = arith.constant 0 : i32
    %c0_i32_0 = arith.constant 0 : i32
    %c0_i32_1 = arith.constant 0 : i32
    return %c0_i32, %c0_i32_0 : i32, i32
  }
  func.func @transform_7(%arg0: i32) -> (i32, i32) {
    %c0_i32 = arith.constant 0 : i32
    %c0_i32_0 = arith.constant 0 : i32
    return %c0_i32, %arg0 : i32, i32
  }
}

</mosaic_0001>

<llo_original>
// kernel: vonmises_density_forward.1
$region0: #{vonmises_density_forward.1}
  #allocation0 [shape = 'u32[]', space=smem, size = 0x4, offset = 0x4, fixed_abs, tag = 'smem constant byte address 0x4 - core index']
  #allocation1 [shape = 'u32[144,128]{1,0:T(1,128)}', space=vmem, size = 0x12000, scoped, tag = 'internal scratch']
  %s0 = inlined_call_operand.vmem [shape: f32[8,16], index: 0, kind: input, shape index: {}]
  %s1 = inlined_call_operand.vmem [shape: f32[32,16], index: 1, kind: input, shape index: {}]
  %s2 = inlined_call_operand.vmem [shape: f32[32,1], index: 2, kind: input, shape index: {}]
  %s3 = inlined_call_operand.vmem [shape: f32[64,32], index: 3, kind: input, shape index: {}]
  %s4 = inlined_call_operand.vmem [shape: f32[64,1], index: 4, kind: input, shape index: {}]
  %s5 = inlined_call_operand.vmem [shape: f32[16,64], index: 5, kind: input, shape index: {}]
  %s6 = inlined_call_operand.vmem [shape: f32[16,1], index: 6, kind: input, shape index: {}]
  %s7 = inlined_call_operand.vmem [shape: f32[16,8], index: 7, kind: output, shape index: {}]
  %s8 = sld [smem:[#allocation0]]
  $region38: #{vonmises_density_forward.1} parent=0
    _
  %s10 = ssub.s32 1, %s8
  %s11 = scalar_select 0, %s10, %s8
  // Predicated region
  $region2: #{vonmises_density_forward.1} parent=0 // pred_check
    _
  $region3: #{vonmises_density_forward.1} parent=0 // pred_check_branch
    %13 = sbr.rel (0) target = $region5
  $region4: #{vonmises_density_forward.1} parent=0 // pred_region
    _
  $region5: #{vonmises_density_forward.1} parent=0 // pred_fallthru
    _
  // Predicated region
  $region6: #{vonmises_density_forward.1} parent=0 // pred_check
    _
  $region7: #{vonmises_density_forward.1} parent=0 // pred_check_branch
    %15 = sbr.rel (0) target = $region9
  $region8: #{vonmises_density_forward.1} parent=0 // pred_region
    _
  $region9: #{vonmises_density_forward.1} parent=0 // pred_fallthru
    _
  // Predicated region
  $region10: #{vonmises_density_forward.1} parent=0 // pred_check
    _
  $region11: #{vonmises_density_forward.1} parent=0 // pred_check_branch
    %17 = sbr.rel (0) target = $region13
  $region12: #{vonmises_density_forward.1} parent=0 // pred_region
    _
  $region13: #{vonmises_density_forward.1} parent=0 // pred_fallthru
    _
  // Predicated region
  $region14: #{vonmises_density_forward.1} parent=0 // pred_check
    _
  $region15: #{vonmises_density_forward.1} parent=0 // pred_check_branch
    %19 = sbr.rel (0) target = $region17
  $region16: #{vonmises_density_forward.1} parent=0 // pred_region
    _
  $region17: #{vonmises_density_forward.1} parent=0 // pred_fallthru
    _
  // Predicated region
  $region18: #{vonmises_density_forward.1} parent=0 // pred_check
    _
  $region19: #{vonmises_density_forward.1} parent=0 // pred_check_branch
    %21 = sbr.rel (0) target = $region21
  $region20: #{vonmises_density_forward.1} parent=0 // pred_region
    _
  $region21: #{vonmises_density_forward.1} parent=0 // pred_fallthru
    _
  // Predicated region
  $region22: #{vonmises_density_forward.1} parent=0 // pred_check
    _
  $region23: #{vonmises_density_forward.1} parent=0 // pred_check_branch
    %23 = sbr.rel (0) target = $region25
  $region24: #{vonmises_density_forward.1} parent=0 // pred_region
    _
  $region25: #{vonmises_density_forward.1} parent=0 // pred_fallthru
    _
  // Predicated region
  $region26: #{vonmises_density_forward.1} parent=0 // pred_check
    _
  $region27: #{vonmises_density_forward.1} parent=0 // pred_check_branch
    %25 = sbr.rel (0) target = $region29
  $region28: #{vonmises_density_forward.1} parent=0 // pred_region
    _
  $region29: #{vonmises_density_forward.1} parent=0 // pred_fallthru
    _
  %v26 = vld [vmem:[%s0] sm:$0xff]
  %v27 = vld [vmem:[%s1] sm:$0xff]
  %v28 = vld [vmem:[%s1 + $0x8] sm:$0xff]
  %v29 = vld [vmem:[%s1 + $0x10] sm:$0xff]
  %v30 = vld [vmem:[%s1 + $0x18] sm:$0xff]
  %v31 = vld [vmem:[%s2] sm:$0xff]
  %v32 = vld [vmem:[%s2 + $0x8] sm:$0xff]
  %v33 = vld [vmem:[%s2 + $0x10] sm:$0xff]
  %v34 = vld [vmem:[%s2 + $0x18] sm:$0xff]
  %36 = vset.pattern.permute.xlu0 0
  %37 = vperm.xlu0 %36, %v31
  %v38 = vpop.permute.xlu0 %37
  %41 = vset.pattern.permute.xlu0 0
  %42 = vperm.xlu0 %41, %v32
  %v43 = vpop.permute.xlu0 %42
  %46 = vset.pattern.permute.xlu0 0
  %47 = vperm.xlu0 %46, %v33
  %v48 = vpop.permute.xlu0 %47
  %51 = vset.pattern.permute.xlu0 0
  %52 = vperm.xlu0 %51, %v34
  %v53 = vpop.permute.xlu0 %52
  %vm55 = vcmask 130048
  %v57 = vsel %vm55, %v27, 0
  %v60 = vsel %vm55, %v28, 0
  %v63 = vsel %vm55, %v29, 0
  %v66 = vsel %vm55, %v30, 0
  %v69 = vsel %vm55, %v26, 0
  %71 = vmatprep.subr.mxu0 0.0
  %72 = vmatpush1.xpose.msra.mxu0 %v69
  %73 = vmatprep.subr.mxu0 0.0
  %74 = vmatpush1.xpose.msra.mxu0 0.0
  %75 = vmatprep.subr.mxu0 0.0
  %76 = vmatpush1.xpose.msra.mxu0 0.0
  %77 = vmatprep.subr.mxu0 0.0
  %78 = vmatpush1.xpose.msra.mxu0 0.0
  %79 = vmatprep.subr.mxu0 0.0
  %80 = vmatpush1.xpose.msra.mxu0 0.0
  %81 = vmatprep.subr.mxu0 0.0
  %82 = vmatpush1.xpose.msra.mxu0 0.0
  %83 = vmatprep.subr.mxu0 0.0
  %84 = vmatpush1.xpose.msra.mxu0 0.0
  %85 = vmatprep.subr.mxu0 0.0
  %86 = vmatpush1.xpose.msra.mxu0 0.0
  %87 = vmatprep.subr.mxu0 0.0
  %88 = vmatpush1.xpose.msra.mxu0 0.0
  %89 = vmatprep.subr.mxu0 0.0
  %90 = vmatpush1.xpose.msra.mxu0 0.0
  %91 = vmatprep.subr.mxu0 0.0
  %92 = vmatpush1.xpose.msra.mxu0 0.0
  %93 = vmatprep.subr.mxu0 0.0
  %94 = vmatpush1.xpose.msra.mxu0 0.0
  %95 = vmatprep.subr.mxu0 0.0
  %96 = vmatpush1.xpose.msra.mxu0 0.0
  %97 = vmatprep.subr.mxu0 0.0
  %98 = vmatpush1.xpose.msra.mxu0 0.0
  %99 = vmatprep.subr.mxu0 0.0
  %100 = vmatpush1.xpose.msra.mxu0 0.0
  %101 = vmatprep.subr.mxu0 0.0
  %102 = vmatpush1.xpose.msra.mxu0 0.0
  %103 = vmatprep.subr.mxu0 0.0
  %104 = vmatpush1.xpose.msra.mxu0 0.0
  %105 = vmatprep.subr.mxu0 0.0
  %106 = vmatpush1.xpose.msra.mxu0 0.0
  %107 = vmatprep.subr.mxu0 0.0
  %108 = vmatpush1.xpose.msra.mxu0 0.0
  %109 = vmatprep.subr.mxu0 0.0
  %110 = vmatpush1.xpose.msra.mxu0 0.0
  %111 = vmatprep.subr.mxu0 0.0
  %112 = vmatpush1.xpose.msra.mxu0 0.0
  %113 = vmatprep.subr.mxu0 0.0
  %114 = vmatpush1.xpose.msra.mxu0 0.0
  %115 = vmatprep.subr.mxu0 0.0
  %116 = vmatpush1.xpose.msra.mxu0 0.0
  %117 = vmatprep.subr.mxu0 0.0
  %118 = vmatpush1.xpose.msra.mxu0 0.0
  %119 = vmatprep.subr.mxu0 0.0
  %120 = vmatpush1.xpose.msra.mxu0 0.0
  %121 = vmatprep.subr.mxu0 0.0
  %122 = vmatpush1.xpose.msra.mxu0 0.0
  %123 = vmatprep.subr.mxu0 0.0
  %124 = vmatpush1.xpose.msra.mxu0 0.0
  %125 = vmatprep.subr.mxu0 0.0
  %126 = vmatpush1.xpose.msra.mxu0 0.0
  %127 = vmatprep.subr.mxu0 0.0
  %128 = vmatpush1.xpose.msra.mxu0 0.0
  %129 = vmatprep.subr.mxu0 0.0
  %130 = vmatpush1.xpose.msra.mxu0 0.0
  %131 = vmatprep.subr.mxu0 0.0
  %132 = vmatpush1.xpose.msra.mxu0 0.0
  %133 = vmatprep.subr.mxu0 0.0
  %134 = vmatpush1.xpose.msra.mxu0 0.0
  %135 = vmatprep.mubr.f32.mxu0 0.0
  %136 = vmatmul.mubr.f32.gmra.mrb[0].mxu0 %v57
  %v137 = vpop.f32.mrb[0].mxu0
  %v138 = vadd.f32 %v38, %v137
  %v139 = vpop.f32.mrb[0].mxu0
  %140 = vmatprep.mubr.f32.mxu0 0.0
  %141 = vmatmul.mubr.f32.gmra.mrb[0].mxu0 %v60
  %v142 = vpop.f32.mrb[0].mxu0
  %v143 = vadd.f32 %v43, %v142
  %v144 = vpop.f32.mrb[0].mxu0
  %145 = vmatprep.mubr.f32.mxu0 0.0
  %146 = vmatmul.mubr.f32.gmra.mrb[0].mxu0 %v63
  %v147 = vpop.f32.mrb[0].mxu0
  %v148 = vadd.f32 %v48, %v147
  %v149 = vpop.f32.mrb[0].mxu0
  %150 = vmatprep.mubr.f32.mxu0 0.0
  %151 = vmatmul.mubr.f32.gmra.mrb[0].mxu0 %v66
  %v152 = vpop.f32.mrb[0].mxu0
  %v153 = vadd.f32 %v53, %v152
  %v154 = vpop.f32.mrb[0].mxu0
  %155 = vdwg.mxu0
  %v156 = vmax.f32 %v138, 0.0
  %v157 = vmax.f32 %v143, 0.0
  %v158 = vmax.f32 %v148, 0.0
  %v159 = vmax.f32 %v153, 0.0
  %v160 = vld [vmem:[%s3] sm:$0xff]
  %v161 = vld [vmem:[%s3 + $0x8] sm:$0xff]
  %v162 = vld [vmem:[%s3 + $0x10] sm:$0xff]
  %v163 = vld [vmem:[%s3 + $0x18] sm:$0xff]
  %v164 = vld [vmem:[%s3 + $0x20] sm:$0xff]
  %v165 = vld [vmem:[%s3 + $0x28] sm:$0xff]
  %v166 = vld [vmem:[%s3 + $0x30] sm:$0xff]
  %v167 = vld [vmem:[%s3 + $0x38] sm:$0xff]
  %v168 = vld [vmem:[%s4] sm:$0xff]
  %v169 = vld [vmem:[%s4 + $0x8] sm:$0xff]
  %v170 = vld [vmem:[%s4 + $0x10] sm:$0xff]
  %v171 = vld [vmem:[%s4 + $0x18] sm:$0xff]
  %v172 = vld [vmem:[%s4 + $0x20] sm:$0xff]
  %v173 = vld [vmem:[%s4 + $0x28] sm:$0xff]
  %v174 = vld [vmem:[%s4 + $0x30] sm:$0xff]
  %v175 = vld [vmem:[%s4 + $0x38] sm:$0xff]
  %177 = vset.pattern.permute.xlu0 0
  %178 = vperm.xlu0 %177, %v168
  %v179 = vpop.permute.xlu0 %178
  %182 = vset.pattern.permute.xlu0 0
  %183 = vperm.xlu0 %182, %v169
  %v184 = vpop.permute.xlu0 %183
  %187 = vset.pattern.permute.xlu0 0
  %188 = vperm.xlu0 %187, %v170
  %v189 = vpop.permute.xlu0 %188
  %192 = vset.pattern.permute.xlu0 0
  %193 = vperm.xlu0 %192, %v171
  %v194 = vpop.permute.xlu0 %193
  %197 = vset.pattern.permute.xlu0 0
  %198 = vperm.xlu0 %197, %v172
  %v199 = vpop.permute.xlu0 %198
  %202 = vset.pattern.permute.xlu0 0
  %203 = vperm.xlu0 %202, %v173
  %v204 = vpop.permute.xlu0 %203
  %207 = vset.pattern.permute.xlu0 0
  %208 = vperm.xlu0 %207, %v174
  %v209 = vpop.permute.xlu0 %208
  %212 = vset.pattern.permute.xlu0 0
  %213 = vperm.xlu0 %212, %v175
  %v214 = vpop.permute.xlu0 %213
  %vm216 = vcmask 261120
  %v218 = vsel %vm216, %v160, 0
  %v221 = vsel %vm216, %v161, 0
  %v224 = vsel %vm216, %v162, 0
  %v227 = vsel %vm216, %v163, 0
  %v230 = vsel %vm216, %v164, 0
  %v233 = vsel %vm216, %v165, 0
  %v236 = vsel %vm216, %v166, 0
  %v239 = vsel %vm216, %v167, 0
  %241 = vmatprep.subr.mxu0 0.0
  %242 = vmatpush1.msra.mxu0 %v156
  %243 = vmatprep.subr.mxu0 0.0
  %244 = vmatpush1.msra.mxu0 %v157
  %245 = vmatprep.subr.mxu0 0.0
  %246 = vmatpush1.msra.mxu0 %v158
  %247 = vmatprep.subr.mxu0 0.0
  %248 = vmatpush1.msra.mxu0 %v159
  %249 = vmatprep.subr.mxu0 0.0
  %250 = vmatpush1.msra.mxu0 0.0
  %251 = vmatprep.subr.mxu0 0.0
  %252 = vmatpush1.msra.mxu0 0.0
  %253 = vmatprep.subr.mxu0 0.0
  %254 = vmatpush1.msra.mxu0 0.0
  %255 = vmatprep.subr.mxu0 0.0
  %256 = vmatpush1.msra.mxu0 0.0
  %257 = vmatprep.subr.mxu0 0.0
  %258 = vmatpush1.msra.mxu0 0.0
  %259 = vmatprep.subr.mxu0 0.0
  %260 = vmatpush1.msra.mxu0 0.0
  %261 = vmatprep.subr.mxu0 0.0
  %262 = vmatpush1.msra.mxu0 0.0
  %263 = vmatprep.subr.mxu0 0.0
  %264 = vmatpush1.msra.mxu0 0.0
  %265 = vmatprep.subr.mxu0 0.0
  %266 = vmatpush1.msra.mxu0 0.0
  %267 = vmatprep.subr.mxu0 0.0
  %268 = vmatpush1.msra.mxu0 0.0
  %269 = vmatprep.subr.mxu0 0.0
  %270 = vmatpush1.msra.mxu0 0.0
  %271 = vmatprep.subr.mxu0 0.0
  %272 = vmatpush1.msra.mxu0 0.0
  %273 = vmatprep.subr.mxu0 0.0
  %274 = vmatpush1.msra.mxu0 0.0
  %275 = vmatprep.subr.mxu0 0.0
  %276 = vmatpush1.msra.mxu0 0.0
  %277 = vmatprep.subr.mxu0 0.0
  %278 = vmatpush1.msra.mxu0 0.0
  %279 = vmatprep.subr.mxu0 0.0
  %280 = vmatpush1.msra.mxu0 0.0
  %281 = vmatprep.subr.mxu0 0.0
  %282 = vmatpush1.msra.mxu0 0.0
  %283 = vmatprep.subr.mxu0 0.0
  %284 = vmatpush1.msra.mxu0 0.0
  %285 = vmatprep.subr.mxu0 0.0
  %286 = vmatpush1.msra.mxu0 0.0
  %287 = vmatprep.subr.mxu0 0.0
  %288 = vmatpush1.msra.mxu0 0.0
  %289 = vmatprep.subr.mxu0 0.0
  %290 = vmatpush1.msra.mxu0 0.0
  %291 = vmatprep.subr.mxu0 0.0
  %292 = vmatpush1.msra.mxu0 0.0
  %293 = vmatprep.subr.mxu0 0.0
  %294 = vmatpush1.msra.mxu0 0.0
  %295 = vmatprep.subr.mxu0 0.0
  %296 = vmatpush1.msra.mxu0 0.0
  %297 = vmatprep.subr.mxu0 0.0
  %298 = vmatpush1.msra.mxu0 0.0
  %299 = vmatprep.subr.mxu0 0.0
  %300 = vmatpush1.msra.mxu0 0.0
  %301 = vmatprep.subr.mxu0 0.0
  %302 = vmatpush1.msra.mxu0 0.0
  %303 = vmatprep.subr.mxu0 0.0
  %304 = vmatpush1.msra.mxu0 0.0
  %305 = vmatprep.mubr.f32.mxu0 0.0
  %306 = vmatmul.mubr.f32.gmra.mrb[0].mxu0 %v218
  %v307 = vpop.f32.mrb[0].mxu0
  %v308 = vadd.f32 %v179, %v307
  %v309 = vpop.f32.mrb[0].mxu0
  %310 = vmatprep.mubr.f32.mxu0 0.0
  %311 = vmatmul.mubr.f32.gmra.mrb[0].mxu0 %v221
  %v312 = vpop.f32.mrb[0].mxu0
  %v313 = vadd.f32 %v184, %v312
  %v314 = vpop.f32.mrb[0].mxu0
  %315 = vmatprep.mubr.f32.mxu0 0.0
  %316 = vmatmul.mubr.f32.gmra.mrb[0].mxu0 %v224
  %v317 = vpop.f32.mrb[0].mxu0
  %v318 = vadd.f32 %v189, %v317
  %v319 = vpop.f32.mrb[0].mxu0
  %320 = vmatprep.mubr.f32.mxu0 0.0
  %321 = vmatmul.mubr.f32.gmra.mrb[0].mxu0 %v227
  %v322 = vpop.f32.mrb[0].mxu0
  %v323 = vadd.f32 %v194, %v322
  %v324 = vpop.f32.mrb[0].mxu0
  %325 = vmatprep.mubr.f32.mxu0 0.0
  %326 = vmatmul.mubr.f32.gmra.mrb[0].mxu0 %v230
  %v327 = vpop.f32.mrb[0].mxu0
  %v328 = vadd.f32 %v199, %v327
  %v329 = vpop.f32.mrb[0].mxu0
  %330 = vmatprep.mubr.f32.mxu0 0.0
  %331 = vmatmul.mubr.f32.gmra.mrb[0].mxu0 %v233
  %v332 = vpop.f32.mrb[0].mxu0
  %v333 = vadd.f32 %v204, %v332
  %v334 = vpop.f32.mrb[0].mxu0
  %335 = vmatprep.mubr.f32.mxu0 0.0
  %336 = vmatmul.mubr.f32.gmra.mrb[0].mxu0 %v236
  %v337 = vpop.f32.mrb[0].mxu0
  %v338 = vadd.f32 %v209, %v337
  %v339 = vpop.f32.mrb[0].mxu0
  %340 = vmatprep.mubr.f32.mxu0 0.0
  %341 = vmatmul.mubr.f32.gmra.mrb[0].mxu0 %v239
  %v342 = vpop.f32.mrb[0].mxu0
  %v343 = vadd.f32 %v214, %v342
  %v344 = vpop.f32.mrb[0].mxu0
  %345 = vdwg.mxu0
  %v346 = vmax.f32 %v308, 0.0
  %v347 = vmax.f32 %v313, 0.0
  %v348 = vmax.f32 %v318, 0.0
  %v349 = vmax.f32 %v323, 0.0
  %v350 = vmax.f32 %v328, 0.0
  %v351 = vmax.f32 %v333, 0.0
  %v352 = vmax.f32 %v338, 0.0
  %v353 = vmax.f32 %v343, 0.0
  %v354 = vld [vmem:[%s5] sm:$0xff]
  %v355 = vld [vmem:[%s5 + $0x8] sm:$0xff]
  %v356 = vld [vmem:[%s6] sm:$0xff]
  %v357 = vld [vmem:[%s6 + $0x8] sm:$0xff]
  %359 = vset.pattern.permute.xlu0 0
  %360 = vperm.xlu0 %359, %v356
  %v361 = vpop.permute.xlu0 %360
  %364 = vset.pattern.permute.xlu0 0
  %365 = vperm.xlu0 %364, %v357
  %v366 = vpop.permute.xlu0 %365
  %vm368 = vcmask 523264
  %v370 = vsel %vm368, %v354, 0
  %v373 = vsel %vm368, %v355, 0
  %375 = vmatprep.subr.mxu0 0.0
  %376 = vmatpush1.msra.mxu0 %v346
  %377 = vmatprep.subr.mxu0 0.0
  %378 = vmatpush1.msra.mxu0 %v347
  %379 = vmatprep.subr.mxu0 0.0
  %380 = vmatpush1.msra.mxu0 %v348
  %381 = vmatprep.subr.mxu0 0.0
  %382 = vmatpush1.msra.mxu0 %v349
  %383 = vmatprep.subr.mxu0 0.0
  %384 = vmatpush1.msra.mxu0 %v350
  %385 = vmatprep.subr.mxu0 0.0
  %386 = vmatpush1.msra.mxu0 %v351
  %387 = vmatprep.subr.mxu0 0.0
  %388 = vmatpush1.msra.mxu0 %v352
  %389 = vmatprep.subr.mxu0 0.0
  %390 = vmatpush1.msra.mxu0 %v353
  %391 = vmatprep.subr.mxu0 0.0
  %392 = vmatpush1.msra.mxu0 0.0
  %393 = vmatprep.subr.mxu0 0.0
  %394 = vmatpush1.msra.mxu0 0.0
  %395 = vmatprep.subr.mxu0 0.0
  %396 = vmatpush1.msra.mxu0 0.0
  %397 = vmatprep.subr.mxu0 0.0
  %398 = vmatpush1.msra.mxu0 0.0
  %399 = vmatprep.subr.mxu0 0.0
  %400 = vmatpush1.msra.mxu0 0.0
  %401 = vmatprep.subr.mxu0 0.0
  %402 = vmatpush1.msra.mxu0 0.0
  %403 = vmatprep.subr.mxu0 0.0
  %404 = vmatpush1.msra.mxu0 0.0
  %405 = vmatprep.subr.mxu0 0.0
  %406 = vmatpush1.msra.mxu0 0.0
  %407 = vmatprep.subr.mxu0 0.0
  %408 = vmatpush1.msra.mxu0 0.0
  %409 = vmatprep.subr.mxu0 0.0
  %410 = vmatpush1.msra.mxu0 0.0
  %411 = vmatprep.subr.mxu0 0.0
  %412 = vmatpush1.msra.mxu0 0.0
  %413 = vmatprep.subr.mxu0 0.0
  %414 = vmatpush1.msra.mxu0 0.0
  %415 = vmatprep.subr.mxu0 0.0
  %416 = vmatpush1.msra.mxu0 0.0
  %417 = vmatprep.subr.mxu0 0.0
  %418 = vmatpush1.msra.mxu0 0.0
  %419 = vmatprep.subr.mxu0 0.0
  %420 = vmatpush1.msra.mxu0 0.0
  %421 = vmatprep.subr.mxu0 0.0
  %422 = vmatpush1.msra.mxu0 0.0
  %423 = vmatprep.subr.mxu0 0.0
  %424 = vmatpush1.msra.mxu0 0.0
  %425 = vmatprep.subr.mxu0 0.0
  %426 = vmatpush1.msra.mxu0 0.0
  %427 = vmatprep.subr.mxu0 0.0
  %428 = vmatpush1.msra.mxu0 0.0
  %429 = vmatprep.subr.mxu0 0.0
  %430 = vmatpush1.msra.mxu0 0.0
  %431 = vmatprep.subr.mxu0 0.0
  %432 = vmatpush1.msra.mxu0 0.0
  %433 = vmatprep.subr.mxu0 0.0
  %434 = vmatpush1.msra.mxu0 0.0
  %435 = vmatprep.subr.mxu0 0.0
  %436 = vmatpush1.msra.mxu0 0.0
  %437 = vmatprep.subr.mxu0 0.0
  %438 = vmatpush1.msra.mxu0 0.0
  %439 = vmatprep.mubr.f32.mxu0 0.0
  %440 = vmatmul.mubr.f32.gmra.mrb[0].mxu0 %v370
  %v441 = vpop.f32.mrb[0].mxu0
  %v442 = vadd.f32 %v361, %v441
  %v443 = vpop.f32.mrb[0].mxu0
  %444 = vmatprep.mubr.f32.mxu0 0.0
  %445 = vmatmul.mubr.f32.gmra.mrb[0].mxu0 %v373
  %v446 = vpop.f32.mrb[0].mxu0
  %v447 = vadd.f32 %v366, %v446
  %v448 = vpop.f32.mrb[0].mxu0
  %449 = vdwg.mxu0
  %v450 = vmul.f32 %v442, 0.15915494
  %v451 = vfloor.f32 %v450
  %v452 = vmul.f32 %v451, 6.2831855
  %v453 = vsub.f32 %v442, %v452
  %v454 = vmax.f32 %v447, -3.0
  %v455 = vmin.f32 %v454, 3.0
  %v456 = vmul.f32 %v455, 1.442695
  %v457 = vpow.pop %v456
  %vm458 = vcmask 64512
  %459 = vst.msk [vmem:[%s7] sm:$0xff] %vm458, %v453
  %460 = vst.msk [vmem:[%s7 + $0x8] sm:$0xff] %vm458, %v457
  // Predicated region
  $region30: #{vonmises_density_forward.1} parent=0 // pred_check
    _
  $region31: #{vonmises_density_forward.1} parent=0 // pred_check_branch
    %462 = sbr.rel (0) target = $region33
  $region32: #{vonmises_density_forward.1} parent=0 // pred_region
    _
  $region33: #{vonmises_density_forward.1} parent=0 // pred_fallthru
    _
  // Predicated region
  $region34: #{vonmises_density_forward.1} parent=0 // pred_check
    _
  $region35: #{vonmises_density_forward.1} parent=0 // pred_check_branch
    %464 = sbr.rel (0) target = $region37
  $region36: #{vonmises_density_forward.1} parent=0 // pred_region
    _
  $region37: #{vonmises_density_forward.1} parent=0 // pred_fallthru
    _

</llo_original>
